<compile_context>
chip_gen: v6e
topology: v6e:2x2x1
jax: 0.10.0
libtpu: 0.0.40
codegen_flags: <defaults>
</compile_context>

<pallas_src>
import jax
import jax.numpy as jnp
import numpy as np
from jax.experimental import pallas as pl
from jax.experimental.pallas import tpu as pltpu


def _make_cnn_kernel(L1, L3):
    Lm = L1 - 1  # number of adjacent-pair pooling windows we materialize

    def kernel(x_ref, w1_ref, b1_ref, w2_ref, b2_ref,
               wf1_ref, bf1_ref, wf2_ref, bf2_ref, out_ref):
        x = x_ref[...]                                               # (TB, Cin*L)

        # ---- conv1 (k=3, VALID) as one banded matmul + bias + ReLU ----
        h1 = jnp.dot(x, w1_ref[...], preferred_element_type=jnp.float32)
        h1 = jnp.maximum(h1 + b1_ref[...], 0.0)                      # (TB, L1*30)

        # ---- MaxPool1d(2): lane-shifted max of adjacent length positions ----
        # m[:, l1*30+c] = max(h1[l1], h1[l1+1])[c]; only even l1 are consumed
        # by the conv2 banded weights (odd rows are zero there).
        m = jnp.maximum(h1[:, : Lm * 30], h1[:, 30:(Lm + 1) * 30])   # (TB, Lm*30)

        # ---- conv2 (k=2, VALID) fused with the pool selection: one matmul ----
        o2 = jnp.dot(m, w2_ref[...], preferred_element_type=jnp.float32)
        o2 = jnp.maximum(o2 + b2_ref[...], 0.0)                      # (TB, L3*20)

        # ---- AdaptiveMaxPool1d(1): max over the L3 position blocks ----
        g = o2[:, 0:20]
        for mp in range(1, L3):
            g = jnp.maximum(g, o2[:, mp * 20:(mp + 1) * 20])         # (TB, 20)

        # ---- fc1 + ReLU, fc2 ----
        f1 = jnp.maximum(
            jnp.dot(g, wf1_ref[...], preferred_element_type=jnp.float32)
            + bf1_ref[...], 0.0)                                     # (TB, 10)
        o = jnp.dot(f1, wf2_ref[...],
                    preferred_element_type=jnp.float32) + bf2_ref[...]  # (TB, n_step)

        # lane-dense store: (n_step, TB) with the batch tile on the lane axis
        out_ref[...] = o.T.astype(out_ref.dtype)

    return kernel


def _pack_params(params, c_in, L, n_step):
    """One-time wrapper-side re-packing into banded matmul weights."""
    w1, b1, w2, b2, wf1, bf1, wf2, bf2 = params
    f32 = jnp.float32
    L1 = L - 2
    L2 = L1 // 2
    L3 = L2 - 1
    Lm = L1 - 1

    w1 = w1.astype(f32)                                   # (30, Cin, 3)
    w2 = w2.astype(f32)                                   # (20, 30, 2)

    # conv1 banded matrix: rows (ic*L + l), cols (l1*30 + oc);
    # nonzero where l == l1 + t, value w1[oc, ic, t].
    W1_big = sum(
        jnp.einsum('lm,oi->ilmo', jnp.eye(L, L1, k=-t, dtype=f32), w1[:, :, t])
        for t in range(3)
    ).reshape(c_in * L, L1 * 30)
    b1_big = jnp.tile(b1.astype(f32), L1).reshape(1, L1 * 30)

    # fused (MaxPool1d(2) -> conv2) banded matrix: rows (l1*30 + ic) over the
    # adjacent-pair max starts l1 in [0, Lm), cols (m*20 + oc);
    # nonzero where l1 == 2*(m + t), value w2[oc, ic, t] (odd l1 rows are zero).
    def sel(t):
        return (jnp.arange(Lm)[:, None]
                == (2 * jnp.arange(L3)[None, :] + 2 * t)).astype(f32)

    W2_big = sum(
        jnp.einsum('lm,oi->limo', sel(t), w2[:, :, t]) for t in range(2)
    ).reshape(Lm * 30, L3 * 20)
    b2_big = jnp.tile(b2.astype(f32), L3).reshape(1, L3 * 20)

    wf1_t = wf1.T.astype(f32)                             # (20, 10)
    wf2_t = wf2.T.astype(f32)                             # (10, n_step)
    bf1r = bf1.reshape(1, 10).astype(f32)
    bf2r = bf2.reshape(1, n_step).astype(f32)
    return W1_big, b1_big, W2_big, b2_big, wf1_t, bf1r, wf2_t, bf2r


def cnn_forward(x_ncl, params, *, batch_tile=512):
    """x_ncl: (B, n_feature, L) float32 (PyTorch Conv1d layout)."""
    B, c_in, L = x_ncl.shape
    n_step = params[7].shape[0]
    L1 = L - 2            # after conv1 (k=3, VALID)
    L2 = L1 // 2          # after MaxPool1d(2)
    L3 = L2 - 1           # after conv2 (k=2, VALID)
    Lm = L1 - 1

    # Batch tiling: TB is a multiple of 8 (sublane aligned); B padded to a
    # multiple of TB so every grid step sees a full tile.
    B8 = -(-B // 8) * 8
    TB = batch_tile if B8 >= batch_tile else B8
    B_pad = -(-B // TB) * TB
    n_tiles = B_pad // TB

    # Free reshape (row-major): column index = ic*L + l.
    x = x_ncl.reshape(B, c_in * L).astype(jnp.float32)
    if B_pad != B:
        x = jnp.pad(x, ((0, B_pad - B), (0, 0)))

    packed = _pack_params(params, c_in, L, n_step)

    out_t = pl.pallas_call(
        _make_cnn_kernel(L1, L3),
        out_shape=jax.ShapeDtypeStruct((n_step, B_pad), jnp.float32),
        grid_spec=pltpu.PrefetchScalarGridSpec(
            num_scalar_prefetch=0,
            grid=(n_tiles,),
            in_specs=[
                pl.BlockSpec((TB, c_in * L), lambda b: (b, 0)),        # x batch tile
                pl.BlockSpec((c_in * L, L1 * 30), lambda b: (0, 0)),   # conv1 banded W
                pl.BlockSpec((1, L1 * 30), lambda b: (0, 0)),          # conv1 bias (tiled)
                pl.BlockSpec((Lm * 30, L3 * 20), lambda b: (0, 0)),    # pool+conv2 banded W
                pl.BlockSpec((1, L3 * 20), lambda b: (0, 0)),          # conv2 bias (tiled)
                pl.BlockSpec((20, 10), lambda b: (0, 0)),              # fc1 weight^T
                pl.BlockSpec((1, 10), lambda b: (0, 0)),               # fc1 bias
                pl.BlockSpec((10, n_step), lambda b: (0, 0)),          # fc2 weight^T
                pl.BlockSpec((1, n_step), lambda b: (0, 0)),           # fc2 bias
            ],
            out_specs=pl.BlockSpec((n_step, TB), lambda b: (0, b)),    # lane-dense
        ),
        compiler_params=pltpu.CompilerParams(
            dimension_semantics=("parallel",)),
    )(x, *packed)

    return out_t[:, :B].T                                              # (B, n_step)


def init_params(key, n_feature, n_step):
    """Deterministic PyTorch-style uniform init (shapes from CNN.__init__)."""
    ks = jax.random.split(key, 8)

    def u(k, shape, bound):
        return jax.random.uniform(k, shape, jnp.float32, -bound, bound)

    b1b = 1.0 / np.sqrt(n_feature * 3)
    w1 = u(ks[0], (30, n_feature, 3), b1b)
    b1 = u(ks[1], (30,), b1b)
    b2b = 1.0 / np.sqrt(30 * 2)
    w2 = u(ks[2], (20, 30, 2), b2b)
    b2 = u(ks[3], (20,), b2b)
    f1b = 1.0 / np.sqrt(20)
    wf1 = u(ks[4], (10, 20), f1b)
    bf1 = u(ks[5], (10,), f1b)
    f2b = 1.0 / np.sqrt(10)
    wf2 = u(ks[6], (n_step, 10), f2b)
    bf2 = u(ks[7], (n_step,), f2b)
    return (w1, b1, w2, b2, wf1, bf1, wf2, bf2)


def reference_forward(x_ncl, params):
    """Pure-JAX reference mirroring the PyTorch forward (NCL layout)."""
    w1, b1, w2, b2, wf1, bf1, wf2, bf2 = params
    dn = ('NCH', 'OIH', 'NCH')
    hp = jax.lax.Precision.HIGHEST
    y = jax.lax.conv_general_dilated(x_ncl, w1, (1,), 'VALID',
                                     dimension_numbers=dn, precision=hp)
    y = jax.nn.relu(y + b1[None, :, None])
    B, C, Lc = y.shape
    Lp = Lc // 2
    y = jnp.max(y[:, :, :2 * Lp].reshape(B, C, Lp, 2), axis=-1)        # MaxPool1d(2)
    y = jax.lax.conv_general_dilated(y, w2, (1,), 'VALID',
                                     dimension_numbers=dn, precision=hp)
    y = jax.nn.relu(y + b2[None, :, None])
    y = jnp.max(y, axis=-1)                                            # AdaptiveMaxPool1d(1)
    y = jax.nn.relu(y @ wf1.T + bf1)
    y = y @ wf2.T + bf2
    return y


if __name__ == "__main__":
    n_feature, n_step = 4, 8
    B, L = 2, 16

    key = jax.random.PRNGKey(0)
    k_x, k_p = jax.random.split(key)
    x = jax.random.normal(k_x, (B, n_feature, L), jnp.float32)         # PyTorch NCL input
    params = init_params(k_p, n_feature, n_step)

    out = cnn_forward(x, params)
    out = jax.block_until_ready(out)

    ref = reference_forward(x, params)
    np.testing.assert_allclose(np.asarray(out), np.asarray(ref), rtol=2e-3, atol=2e-3)
    assert out.shape == (B, n_step)
    print("KERNEL_OK")
</pallas_src>

<mosaic_0001>
module attributes {stable_mosaic.version = 11 : i64} {
  func.func @kernel(%arg0: i32, %arg1: memref<8x64xf32, #tpu.memory_space<vmem>>, %arg2: memref<64x420xf32, #tpu.memory_space<vmem>>, %arg3: memref<1x420xf32, #tpu.memory_space<vmem>>, %arg4: memref<390x120xf32, #tpu.memory_space<vmem>>, %arg5: memref<1x120xf32, #tpu.memory_space<vmem>>, %arg6: memref<20x10xf32, #tpu.memory_space<vmem>>, %arg7: memref<1x10xf32, #tpu.memory_space<vmem>>, %arg8: memref<10x8xf32, #tpu.memory_space<vmem>>, %arg9: memref<1x8xf32, #tpu.memory_space<vmem>>, %arg10: memref<8x8xf32, #tpu.memory_space<vmem>>) attributes {dimension_semantics = [#tpu.dimension_semantics<parallel>], iteration_bounds = array<i64: 1>, scalar_prefetch = 0 : i64, scratch_operands = 0 : i64, tpu.core_type = #tpu.core_type<tc>, window_params = [{transform_indices = @transform_0, window_bounds = array<i64: 8, 64>}, {pipeline_mode = #tpu.pipeline_mode<synchronous>, transform_indices = @transform_1, window_bounds = array<i64: 64, 420>}, {pipeline_mode = #tpu.pipeline_mode<synchronous>, transform_indices = @transform_2, window_bounds = array<i64: 1, 420>}, {pipeline_mode = #tpu.pipeline_mode<synchronous>, transform_indices = @transform_3, window_bounds = array<i64: 390, 120>}, {pipeline_mode = #tpu.pipeline_mode<synchronous>, transform_indices = @transform_4, window_bounds = array<i64: 1, 120>}, {pipeline_mode = #tpu.pipeline_mode<synchronous>, transform_indices = @transform_5, window_bounds = array<i64: 20, 10>}, {pipeline_mode = #tpu.pipeline_mode<synchronous>, transform_indices = @transform_6, window_bounds = array<i64: 1, 10>}, {pipeline_mode = #tpu.pipeline_mode<synchronous>, transform_indices = @transform_7, window_bounds = array<i64: 10, 8>}, {pipeline_mode = #tpu.pipeline_mode<synchronous>, transform_indices = @transform_8, window_bounds = array<i64: 1, 8>}, {transform_indices = @transform_9, window_bounds = array<i64: 8, 8>}]} {
    %c0 = arith.constant 0 : index
    %c0_0 = arith.constant 0 : index
    %0 = vector.load %arg1[%c0, %c0_0] : memref<8x64xf32, #tpu.memory_space<vmem>>, vector<8x64xf32>
    %c0_1 = arith.constant 0 : index
    %c0_2 = arith.constant 0 : index
    %1 = vector.load %arg2[%c0_1, %c0_2] : memref<64x420xf32, #tpu.memory_space<vmem>>, vector<64x420xf32>
    %cst = arith.constant dense<0.000000e+00> : vector<8x420xf32>
    %2 = tpu.matmul %0, %1, %cst {dimension_numbers = #tpu.dot_dimension_numbers<[1], [0], [0], [1], [0, 0, 1, 1], [], []>} : vector<8x64xf32>, vector<64x420xf32>, vector<8x420xf32> -> vector<8x420xf32>
    %c0_3 = arith.constant 0 : index
    %c0_4 = arith.constant 0 : index
    %3 = vector.load %arg3[%c0_3, %c0_4] : memref<1x420xf32, #tpu.memory_space<vmem>>, vector<1x420xf32>
    %4 = vector.broadcast %3 : vector<1x420xf32> to vector<8x420xf32>
    %5 = arith.addf %2, %4 : vector<8x420xf32>
    %cst_5 = arith.constant 0.000000e+00 : f32
    %6 = vector.broadcast %cst_5 : f32 to vector<8x420xf32>
    %7 = arith.maximumf %5, %6 : vector<8x420xf32>
    %8 = vector.extract_strided_slice %7 {offsets = [0, 0], sizes = [8, 390], strides = [1, 1]} : vector<8x420xf32> to vector<8x390xf32>
    %9 = vector.extract_strided_slice %7 {offsets = [0, 30], sizes = [8, 390], strides = [1, 1]} : vector<8x420xf32> to vector<8x390xf32>
    %10 = arith.maximumf %8, %9 : vector<8x390xf32>
    %c0_6 = arith.constant 0 : index
    %c0_7 = arith.constant 0 : index
    %11 = vector.load %arg4[%c0_6, %c0_7] : memref<390x120xf32, #tpu.memory_space<vmem>>, vector<390x120xf32>
    %cst_8 = arith.constant dense<0.000000e+00> : vector<8x120xf32>
    %12 = tpu.matmul %10, %11, %cst_8 {dimension_numbers = #tpu.dot_dimension_numbers<[1], [0], [0], [1], [0, 0, 1, 1], [], []>} : vector<8x390xf32>, vector<390x120xf32>, vector<8x120xf32> -> vector<8x120xf32>
    %c0_9 = arith.constant 0 : index
    %c0_10 = arith.constant 0 : index
    %13 = vector.load %arg5[%c0_9, %c0_10] : memref<1x120xf32, #tpu.memory_space<vmem>>, vector<1x120xf32>
    %14 = vector.broadcast %13 : vector<1x120xf32> to vector<8x120xf32>
    %15 = arith.addf %12, %14 : vector<8x120xf32>
    %cst_11 = arith.constant 0.000000e+00 : f32
    %16 = vector.broadcast %cst_11 : f32 to vector<8x120xf32>
    %17 = arith.maximumf %15, %16 : vector<8x120xf32>
    %18 = vector.extract_strided_slice %17 {offsets = [0, 0], sizes = [8, 20], strides = [1, 1]} : vector<8x120xf32> to vector<8x20xf32>
    %19 = vector.extract_strided_slice %17 {offsets = [0, 20], sizes = [8, 20], strides = [1, 1]} : vector<8x120xf32> to vector<8x20xf32>
    %20 = arith.maximumf %18, %19 : vector<8x20xf32>
    %21 = vector.extract_strided_slice %17 {offsets = [0, 40], sizes = [8, 20], strides = [1, 1]} : vector<8x120xf32> to vector<8x20xf32>
    %22 = arith.maximumf %20, %21 : vector<8x20xf32>
    %23 = vector.extract_strided_slice %17 {offsets = [0, 60], sizes = [8, 20], strides = [1, 1]} : vector<8x120xf32> to vector<8x20xf32>
    %24 = arith.maximumf %22, %23 : vector<8x20xf32>
    %25 = vector.extract_strided_slice %17 {offsets = [0, 80], sizes = [8, 20], strides = [1, 1]} : vector<8x120xf32> to vector<8x20xf32>
    %26 = arith.maximumf %24, %25 : vector<8x20xf32>
    %27 = vector.extract_strided_slice %17 {offsets = [0, 100], sizes = [8, 20], strides = [1, 1]} : vector<8x120xf32> to vector<8x20xf32>
    %28 = arith.maximumf %26, %27 : vector<8x20xf32>
    %c0_12 = arith.constant 0 : index
    %c0_13 = arith.constant 0 : index
    %29 = vector.load %arg6[%c0_12, %c0_13] : memref<20x10xf32, #tpu.memory_space<vmem>>, vector<20x10xf32>
    %cst_14 = arith.constant dense<0.000000e+00> : vector<8x10xf32>
    %30 = tpu.matmul %28, %29, %cst_14 {dimension_numbers = #tpu.dot_dimension_numbers<[1], [0], [0], [1], [0, 0, 1, 1], [], []>} : vector<8x20xf32>, vector<20x10xf32>, vector<8x10xf32> -> vector<8x10xf32>
    %c0_15 = arith.constant 0 : index
    %c0_16 = arith.constant 0 : index
    %31 = vector.load %arg7[%c0_15, %c0_16] : memref<1x10xf32, #tpu.memory_space<vmem>>, vector<1x10xf32>
    %32 = vector.broadcast %31 : vector<1x10xf32> to vector<8x10xf32>
    %33 = arith.addf %30, %32 : vector<8x10xf32>
    %cst_17 = arith.constant 0.000000e+00 : f32
    %34 = vector.broadcast %cst_17 : f32 to vector<8x10xf32>
    %35 = arith.maximumf %33, %34 : vector<8x10xf32>
    %c0_18 = arith.constant 0 : index
    %c0_19 = arith.constant 0 : index
    %36 = vector.load %arg8[%c0_18, %c0_19] : memref<10x8xf32, #tpu.memory_space<vmem>>, vector<10x8xf32>
    %cst_20 = arith.constant dense<0.000000e+00> : vector<8x8xf32>
    %37 = tpu.matmul %35, %36, %cst_20 {dimension_numbers = #tpu.dot_dimension_numbers<[1], [0], [0], [1], [0, 0, 1, 1], [], []>} : vector<8x10xf32>, vector<10x8xf32>, vector<8x8xf32> -> vector<8x8xf32>
    %c0_21 = arith.constant 0 : index
    %c0_22 = arith.constant 0 : index
    %38 = vector.load %arg9[%c0_21, %c0_22] : memref<1x8xf32, #tpu.memory_space<vmem>>, vector<1x8xf32>
    %39 = vector.broadcast %38 : vector<1x8xf32> to vector<8x8xf32>
    %40 = arith.addf %37, %39 : vector<8x8xf32>
    %41 = tpu.transpose %40, [1, 0] : vector<8x8xf32> -> vector<8x8xf32>
    %c0_23 = arith.constant 0 : index
    %c0_24 = arith.constant 0 : index
    %42 = vector.load %arg10[%c0_23, %c0_24] : memref<8x8xf32, #tpu.memory_space<vmem>>, vector<8x8xf32>
    tpu.vector_store %arg10[%c0_23, %c0_24], %41 {strides = array<i32>} : memref<8x8xf32, #tpu.memory_space<vmem>>, vector<8x8xf32>,
    return
  }
  func.func @transform_0(%arg0: i32) -> (i32, i32) {
    %c0_i32 = arith.constant 0 : i32
    %c0_i32_0 = arith.constant 0 : i32
    return %arg0, %c0_i32 : i32, i32
  }
  func.func @transform_1(%arg0: i32) -> (i32, i32) {
    %c0_i32 = arith.constant 0 : i32
    %c0_i32_0 = arith.constant 0 : i32
    %c0_i32_1 = arith.constant 0 : i32
    return %c0_i32, %c0_i32_0 : i32, i32
  }
  func.func @transform_2(%arg0: i32) -> (i32, i32) {
    %c0_i32 = arith.constant 0 : i32
    %c0_i32_0 = arith.constant 0 : i32
    %c0_i32_1 = arith.constant 0 : i32
    return %c0_i32, %c0_i32_0 : i32, i32
  }
  func.func @transform_3(%arg0: i32) -> (i32, i32) {
    %c0_i32 = arith.constant 0 : i32
    %c0_i32_0 = arith.constant 0 : i32
    %c0_i32_1 = arith.constant 0 : i32
    return %c0_i32, %c0_i32_0 : i32, i32
  }
  func.func @transform_4(%arg0: i32) -> (i32, i32) {
    %c0_i32 = arith.constant 0 : i32
    %c0_i32_0 = arith.constant 0 : i32
    %c0_i32_1 = arith.constant 0 : i32
    return %c0_i32, %c0_i32_0 : i32, i32
  }
  func.func @transform_5(%arg0: i32) -> (i32, i32) {
    %c0_i32 = arith.constant 0 : i32
    %c0_i32_0 = arith.constant 0 : i32
    %c0_i32_1 = arith.constant 0 : i32
    return %c0_i32, %c0_i32_0 : i32, i32
  }
  func.func @transform_6(%arg0: i32) -> (i32, i32) {
    %c0_i32 = arith.constant 0 : i32
    %c0_i32_0 = arith.constant 0 : i32
    %c0_i32_1 = arith.constant 0 : i32
    return %c0_i32, %c0_i32_0 : i32, i32
  }
  func.func @transform_7(%arg0: i32) -> (i32, i32) {
    %c0_i32 = arith.constant 0 : i32
    %c0_i32_0 = arith.constant 0 : i32
    %c0_i32_1 = arith.constant 0 : i32
    return %c0_i32, %c0_i32_0 : i32, i32
  }
  func.func @transform_8(%arg0: i32) -> (i32, i32) {
    %c0_i32 = arith.constant 0 : i32
    %c0_i32_0 = arith.constant 0 : i32
    %c0_i32_1 = arith.constant 0 : i32
    return %c0_i32, %c0_i32_0 : i32, i32
  }
  func.func @transform_9(%arg0: i32) -> (i32, i32) {
    %c0_i32 = arith.constant 0 : i32
    %c0_i32_0 = arith.constant 0 : i32
    return %c0_i32, %arg0 : i32, i32
  }
}

</mosaic_0001>

<llo_original>
// kernel: tpu_custom_call.1
$region0: #{tpu_custom_call.1}
  #allocation0 [shape = 'u32[]', space=smem, size = 0x4, offset = 0x4, fixed_abs, tag = 'smem constant byte address 0x4 - core index']
  #allocation1 [shape = 'u32[144,128]{1,0:T(1,128)}', space=vmem, size = 0x12000, scoped, tag = 'internal scratch']
  %s0 = inlined_call_operand.vmem [shape: f32[8,64], index: 0, kind: input, shape index: {}]
  %s1 = inlined_call_operand.hbm [shape: f32[64,420], index: 1, kind: input, shape index: {}]
  %s2 = inlined_call_operand.vmem [shape: f32[1,420], index: 2, kind: input, shape index: {}]
  %s3 = inlined_call_operand.hbm [shape: f32[390,120], index: 3, kind: input, shape index: {}]
  %s4 = inlined_call_operand.vmem [shape: f32[1,120], index: 4, kind: input, shape index: {}]
  %s5 = inlined_call_operand.vmem [shape: f32[20,10], index: 5, kind: input, shape index: {}]
  %s6 = inlined_call_operand.vmem [shape: f32[1,10], index: 6, kind: input, shape index: {}]
  %s7 = inlined_call_operand.vmem [shape: f32[10,8], index: 7, kind: input, shape index: {}]
  %s8 = inlined_call_operand.vmem [shape: f32[1,8], index: 8, kind: input, shape index: {}]
  %s9 = inlined_call_operand.hbm [shape: f32[8,8], index: 9, kind: output, shape index: {}]
  %s10 = sld [smem:[#allocation0]]
  $region54: #{tpu_custom_call.1} parent=0
    _
  %s12 = ssub.s32 1, %s10
  %s13 = scalar_select 0, %s12, %s10
  $region1: #{tpu_custom_call.1} parent=0
    #allocation2 [shape = 'u8[131072]{0}', space=vmem, size = 0x20000, scoped, tag = 'input window, operand 1, single buffered']
    #allocation3 [shape = 's32[1]{0}', space=sflag, size = 0x4, scoped, tag = 'scoped memory for tpu_custom_call.1']
    #allocation4 [shape = 's32[1]{0}', space=sflag, size = 0x4, scoped, tag = 'scoped memory for tpu_custom_call.1']
    #allocation5 [shape = 'u8[200704]{0}', space=vmem, size = 0x31000, scoped, tag = 'input window, operand 3, single buffered']
    #allocation6 [shape = 's32[1]{0}', space=sflag, size = 0x4, scoped, tag = 'scoped memory for tpu_custom_call.1']
    #allocation7 [shape = 'u8[4096]{0}', space=vmem, size = 0x1000, scoped, tag = 'output window, operand 0, single buffered']
    %14 = vsyncpa [#allocation3], 0
    %15 = vsyncpa [#allocation6], 0
    %16 = vsyncpa [#allocation4], 0
    // Predicated region
    $region2: #{tpu_custom_call.1} parent=1 // pred_check
      _
    $region3: #{tpu_custom_call.1} parent=1 // pred_check_branch
      %18 = sbr.rel (0) target = $region5
    $region4: #{tpu_custom_call.1} parent=1 // pred_region
      _
    $region5: #{tpu_custom_call.1} parent=1 // pred_fallthru
      _
    // Predicated region
    $region6: #{tpu_custom_call.1} parent=1 // pred_check
      _
    $region7: #{tpu_custom_call.1} parent=1 // pred_check_branch
      %20 = sbr.rel (0) target = $region9
    $region8: #{tpu_custom_call.1} parent=1 // pred_region
      %s22 = ssub.s32 4096, 4096
      %23 = vsyncadd [#allocation3], %s22
      %s24 = sshll.u32 [#allocation2], 4
      %s25 = int_to_ptr.vmem [resolvable:$true] %s24
      %30 = dma.hbm_to_vmem [thread:$0]  %s1, 4096, %s25, [#allocation3], 512, 512, 32
    $region9: #{tpu_custom_call.1} parent=1 // pred_fallthru
      _
    // Predicated region
    $region10: #{tpu_custom_call.1} parent=1 // pred_check
      _
    $region11: #{tpu_custom_call.1} parent=1 // pred_check_branch
      %32 = sbr.rel (0) target = $region13
    $region12: #{tpu_custom_call.1} parent=1 // pred_region
      _
    $region13: #{tpu_custom_call.1} parent=1 // pred_fallthru
      _
    // Predicated region
    $region14: #{tpu_custom_call.1} parent=1 // pred_check
      _
    $region15: #{tpu_custom_call.1} parent=1 // pred_check_branch
      %34 = sbr.rel (0) target = $region17
    $region16: #{tpu_custom_call.1} parent=1 // pred_region
      %s36 = ssub.s32 6272, 6272
      %37 = vsyncadd [#allocation6], %s36
      %s38 = sshll.u32 [#allocation5], 4
      %s39 = int_to_ptr.vmem [resolvable:$true] %s38
      %44 = dma.hbm_to_vmem [thread:$0]  %s3, 6272, %s39, [#allocation6], 128, 128, 8
    $region17: #{tpu_custom_call.1} parent=1 // pred_fallthru
      _
    // Predicated region
    $region18: #{tpu_custom_call.1} parent=1 // pred_check
      _
    $region19: #{tpu_custom_call.1} parent=1 // pred_check_branch
      %46 = sbr.rel (0) target = $region21
    $region20: #{tpu_custom_call.1} parent=1 // pred_region
      _
    $region21: #{tpu_custom_call.1} parent=1 // pred_fallthru
      _
    // Predicated region
    $region22: #{tpu_custom_call.1} parent=1 // pred_check
      _
    $region23: #{tpu_custom_call.1} parent=1 // pred_check_branch
      %48 = sbr.rel (0) target = $region25
    $region24: #{tpu_custom_call.1} parent=1 // pred_region
      _
    $region25: #{tpu_custom_call.1} parent=1 // pred_fallthru
      _
    // Predicated region
    $region26: #{tpu_custom_call.1} parent=1 // pred_check
      _
    $region27: #{tpu_custom_call.1} parent=1 // pred_check_branch
      %50 = sbr.rel (0) target = $region29
    $region28: #{tpu_custom_call.1} parent=1 // pred_region
      _
    $region29: #{tpu_custom_call.1} parent=1 // pred_fallthru
      _
    // Predicated region
    $region30: #{tpu_custom_call.1} parent=1 // pred_check
      _
    $region31: #{tpu_custom_call.1} parent=1 // pred_check_branch
      %52 = sbr.rel (0) target = $region33
    $region32: #{tpu_custom_call.1} parent=1 // pred_region
      _
    $region33: #{tpu_custom_call.1} parent=1 // pred_fallthru
      _
    // Predicated region
    $region34: #{tpu_custom_call.1} parent=1 // pred_check
      _
    $region35: #{tpu_custom_call.1} parent=1 // pred_check_branch
      %54 = sbr.rel (0) target = $region37
    $region36: #{tpu_custom_call.1} parent=1 // pred_region
      _
    $region37: #{tpu_custom_call.1} parent=1 // pred_fallthru
      _
    // Predicated region
    $region38: #{tpu_custom_call.1} parent=1 // pred_check
      _
    $region39: #{tpu_custom_call.1} parent=1 // pred_check_branch
      %56 = sbr.rel (0) target = $region41
    $region40: #{tpu_custom_call.1} parent=1 // pred_region
      %57 = dma.done [#allocation3], 4096
    $region41: #{tpu_custom_call.1} parent=1 // pred_fallthru
      _
    // Predicated region
    $region42: #{tpu_custom_call.1} parent=1 // pred_check
      _
    $region43: #{tpu_custom_call.1} parent=1 // pred_check_branch
      %59 = sbr.rel (0) target = $region45
    $region44: #{tpu_custom_call.1} parent=1 // pred_region
      %60 = dma.done [#allocation6], 6272
    $region45: #{tpu_custom_call.1} parent=1 // pred_fallthru
      _
    %v61 = vld [vmem:[%s0] sm:$0xff]
    %v62 = vld [vmem:[#allocation2] sm:$0xff]
    %v63 = vld [vmem:[#allocation2 + $0x8] sm:$0xff]
    %v64 = vld [vmem:[#allocation2 + $0x10] sm:$0xff]
    %v65 = vld [vmem:[#allocation2 + $0x18] sm:$0xff]
    %v66 = vld [vmem:[#allocation2 + $0x20] sm:$0xff]
    %v67 = vld [vmem:[#allocation2 + $0x28] sm:$0xff]
    %v68 = vld [vmem:[#allocation2 + $0x30] sm:$0xff]
    %v69 = vld [vmem:[#allocation2 + $0x38] sm:$0xff]
    %v70 = vld [vmem:[#allocation2 + $0x40] sm:$0xff]
    %v71 = vld [vmem:[#allocation2 + $0x48] sm:$0xff]
    %v72 = vld [vmem:[#allocation2 + $0x50] sm:$0xff]
    %v73 = vld [vmem:[#allocation2 + $0x58] sm:$0xff]
    %v74 = vld [vmem:[#allocation2 + $0x60] sm:$0xff]
    %v75 = vld [vmem:[#allocation2 + $0x68] sm:$0xff]
    %v76 = vld [vmem:[#allocation2 + $0x70] sm:$0xff]
    %v77 = vld [vmem:[#allocation2 + $0x78] sm:$0xff]
    %v78 = vld [vmem:[#allocation2 + $0x80] sm:$0xff]
    %v79 = vld [vmem:[#allocation2 + $0x88] sm:$0xff]
    %v80 = vld [vmem:[#allocation2 + $0x90] sm:$0xff]
    %v81 = vld [vmem:[#allocation2 + $0x98] sm:$0xff]
    %v82 = vld [vmem:[#allocation2 + $0xa0] sm:$0xff]
    %v83 = vld [vmem:[#allocation2 + $0xa8] sm:$0xff]
    %v84 = vld [vmem:[#allocation2 + $0xb0] sm:$0xff]
    %v85 = vld [vmem:[#allocation2 + $0xb8] sm:$0xff]
    %v86 = vld [vmem:[#allocation2 + $0xc0] sm:$0xff]
    %v87 = vld [vmem:[#allocation2 + $0xc8] sm:$0xff]
    %v88 = vld [vmem:[#allocation2 + $0xd0] sm:$0xff]
    %v89 = vld [vmem:[#allocation2 + $0xd8] sm:$0xff]
    %v90 = vld [vmem:[#allocation2 + $0xe0] sm:$0xff]
    %v91 = vld [vmem:[#allocation2 + $0xe8] sm:$0xff]
    %v92 = vld [vmem:[#allocation2 + $0xf0] sm:$0xff]
    %v93 = vld [vmem:[#allocation2 + $0xf8] sm:$0xff]
    %v94 = vld [vmem:[%s2] sm:$0xf]
    %v96 = vlaneseq
    %v97 = vshrl.u32 %v96, 7
    %v98 = vsub.s32 0, %v97
    %v99 = vrot.slane %v94, %v98
    %v100 = vlaneseq
    %v101 = vshrl.u32 %v100, 7
    %v102 = vsub.s32 1, %v101
    %v103 = vrot.slane %v94, %v102
    %v104 = vlaneseq
    %v105 = vshrl.u32 %v104, 7
    %v106 = vsub.s32 2, %v105
    %v107 = vrot.slane %v94, %v106
    %v108 = vlaneseq
    %v109 = vshrl.u32 %v108, 7
    %v110 = vsub.s32 3, %v109
    %v111 = vrot.slane %v94, %v110
    %vm116 = vcmask 523264
    %v118 = vsel %vm116, %v61, 0
    %120 = vmatprep.subr.mxu0 0.0
    %121 = vmatpush1.msra.mxu0 0.0
    %122 = vmatprep.subr.mxu0 0.0
    %123 = vmatpush1.msra.mxu0 0.0
    %124 = vmatprep.subr.mxu0 0.0
    %125 = vmatpush1.msra.mxu0 0.0
    %126 = vmatprep.subr.mxu0 0.0
    %127 = vmatpush1.msra.mxu0 0.0
    %128 = vmatprep.subr.mxu0 0.0
    %129 = vmatpush1.msra.mxu0 0.0
    %130 = vmatprep.subr.mxu0 0.0
    %131 = vmatpush1.msra.mxu0 0.0
    %132 = vmatprep.subr.mxu0 0.0
    %133 = vmatpush1.msra.mxu0 0.0
    %134 = vmatprep.subr.mxu0 0.0
    %135 = vmatpush1.msra.mxu0 0.0
    %136 = vmatprep.subr.mxu0 %v91
    %137 = vmatpush1.msra.mxu0 %v90
    %138 = vmatprep.subr.mxu0 %v87
    %139 = vmatpush1.msra.mxu0 %v86
    %140 = vmatprep.subr.mxu0 %v83
    %141 = vmatpush1.msra.mxu0 %v82
    %142 = vmatprep.subr.mxu0 %v79
    %143 = vmatpush1.msra.mxu0 %v78
    %144 = vmatprep.subr.mxu0 %v75
    %145 = vmatpush1.msra.mxu0 %v74
    %146 = vmatprep.subr.mxu0 %v71
    %147 = vmatpush1.msra.mxu0 %v70
    %148 = vmatprep.subr.mxu0 %v67
    %149 = vmatpush1.msra.mxu0 %v66
    %150 = vmatprep.subr.mxu0 %v63
    %151 = vmatpush1.msra.mxu0 %v62
    %152 = vmatprep.subr.mxu0 0.0
    %153 = vmatpush2.msra.mxu0 0.0
    %154 = vmatprep.subr.mxu0 0.0
    %155 = vmatpush2.msra.mxu0 0.0
    %156 = vmatprep.subr.mxu0 0.0
    %157 = vmatpush2.msra.mxu0 0.0
    %158 = vmatprep.subr.mxu0 0.0
    %159 = vmatpush2.msra.mxu0 0.0
    %160 = vmatprep.subr.mxu0 0.0
    %161 = vmatpush2.msra.mxu0 0.0
    %162 = vmatprep.subr.mxu0 0.0
    %163 = vmatpush2.msra.mxu0 0.0
    %164 = vmatprep.subr.mxu0 0.0
    %165 = vmatpush2.msra.mxu0 0.0
    %166 = vmatprep.subr.mxu0 0.0
    %167 = vmatpush2.msra.mxu0 0.0
    %168 = vmatprep.subr.mxu0 0.0
    %169 = vmatpush2.msra.mxu0 0.0
    %170 = vmatprep.subr.mxu0 0.0
    %171 = vmatpush2.msra.mxu0 0.0
    %172 = vmatprep.subr.mxu0 0.0
    %173 = vmatpush2.msra.mxu0 0.0
    %174 = vmatprep.subr.mxu0 0.0
    %175 = vmatpush2.msra.mxu0 0.0
    %176 = vmatprep.subr.mxu0 0.0
    %177 = vmatpush2.msra.mxu0 0.0
    %178 = vmatprep.subr.mxu0 0.0
    %179 = vmatpush2.msra.mxu0 0.0
    %180 = vmatprep.subr.mxu0 0.0
    %181 = vmatpush2.msra.mxu0 0.0
    %182 = vmatprep.subr.mxu0 0.0
    %183 = vmatpush2.msra.mxu0 0.0
    %184 = vmatprep.mubr.f32.mxu0 0.0
    %185 = vmatmul.mubr.f32.gmra.mxu0 %v118
    %v186 = vpop.f32.mrf.mxu0
    %v187 = vadd.f32 %v99, %v186
    %v188 = vpop.f32.mrf.mxu0
    %v189 = vadd.f32 %v103, %v188
    %190 = vdwg.mxu0
    %191 = vmatprep.subr.mxu0 0.0
    %192 = vmatpush1.msra.mxu0 0.0
    %193 = vmatprep.subr.mxu0 0.0
    %194 = vmatpush1.msra.mxu0 0.0
    %195 = vmatprep.subr.mxu0 0.0
    %196 = vmatpush1.msra.mxu0 0.0
    %197 = vmatprep.subr.mxu0 0.0
    %198 = vmatpush1.msra.mxu0 0.0
    %199 = vmatprep.subr.mxu0 0.0
    %200 = vmatpush1.msra.mxu0 0.0
    %201 = vmatprep.subr.mxu0 0.0
    %202 = vmatpush1.msra.mxu0 0.0
    %203 = vmatprep.subr.mxu0 0.0
    %204 = vmatpush1.msra.mxu0 0.0
    %205 = vmatprep.subr.mxu0 0.0
    %206 = vmatpush1.msra.mxu0 0.0
    %207 = vmatprep.subr.mxu0 %v93
    %208 = vmatpush1.msra.mxu0 %v92
    %209 = vmatprep.subr.mxu0 %v89
    %210 = vmatpush1.msra.mxu0 %v88
    %211 = vmatprep.subr.mxu0 %v85
    %212 = vmatpush1.msra.mxu0 %v84
    %213 = vmatprep.subr.mxu0 %v81
    %214 = vmatpush1.msra.mxu0 %v80
    %215 = vmatprep.subr.mxu0 %v77
    %216 = vmatpush1.msra.mxu0 %v76
    %217 = vmatprep.subr.mxu0 %v73
    %218 = vmatpush1.msra.mxu0 %v72
    %219 = vmatprep.subr.mxu0 %v69
    %220 = vmatpush1.msra.mxu0 %v68
    %221 = vmatprep.subr.mxu0 %v65
    %222 = vmatpush1.msra.mxu0 %v64
    %223 = vmatprep.subr.mxu0 0.0
    %224 = vmatpush2.msra.mxu0 0.0
    %225 = vmatprep.subr.mxu0 0.0
    %226 = vmatpush2.msra.mxu0 0.0
    %227 = vmatprep.subr.mxu0 0.0
    %228 = vmatpush2.msra.mxu0 0.0
    %229 = vmatprep.subr.mxu0 0.0
    %230 = vmatpush2.msra.mxu0 0.0
    %231 = vmatprep.subr.mxu0 0.0
    %232 = vmatpush2.msra.mxu0 0.0
    %233 = vmatprep.subr.mxu0 0.0
    %234 = vmatpush2.msra.mxu0 0.0
    %235 = vmatprep.subr.mxu0 0.0
    %236 = vmatpush2.msra.mxu0 0.0
    %237 = vmatprep.subr.mxu0 0.0
    %238 = vmatpush2.msra.mxu0 0.0
    %239 = vmatprep.subr.mxu0 0.0
    %240 = vmatpush2.msra.mxu0 0.0
    %241 = vmatprep.subr.mxu0 0.0
    %242 = vmatpush2.msra.mxu0 0.0
    %243 = vmatprep.subr.mxu0 0.0
    %244 = vmatpush2.msra.mxu0 0.0
    %245 = vmatprep.subr.mxu0 0.0
    %246 = vmatpush2.msra.mxu0 0.0
    %247 = vmatprep.subr.mxu0 0.0
    %248 = vmatpush2.msra.mxu0 0.0
    %249 = vmatprep.subr.mxu0 0.0
    %250 = vmatpush2.msra.mxu0 0.0
    %251 = vmatprep.subr.mxu0 0.0
    %252 = vmatpush2.msra.mxu0 0.0
    %253 = vmatprep.subr.mxu0 0.0
    %254 = vmatpush2.msra.mxu0 0.0
    %255 = vmatprep.mubr.f32.mxu0 0.0
    %256 = vmatmul.mubr.f32.gmra.mxu0 %v118
    %v257 = vpop.f32.mrf.mxu0
    %v258 = vadd.f32 %v107, %v257
    %v259 = vpop.f32.mrf.mxu0
    %v260 = vadd.f32 %v111, %v259
    %261 = vdwg.mxu0
    %v262 = vmax.f32 %v187, 0.0
    %v263 = vmax.f32 %v189, 0.0
    %v264 = vmax.f32 %v258, 0.0
    %v265 = vmax.f32 %v260, 0.0
    %270 = vrot.lane.b32.xlu0 %v262, 98
    %v271 = vpop.permute.xlu0 %270
    %272 = vrot.lane.b32.xlu0 %v263, 98
    %v273 = vpop.permute.xlu0 %272
    %274 = vrot.lane.b32.xlu0 %v264, 98
    %v275 = vpop.permute.xlu0 %274
    %276 = vrot.lane.b32.xlu0 %v265, 98
    %v277 = vpop.permute.xlu0 %276
    %vm278 = vcmask 801792
    %v279 = vsel %vm278, %v271, %v273
    %v280 = vsel %vm278, %v273, %v275
    %v281 = vsel %vm278, %v275, %v277
    %v286 = vmax.f32 %v262, %v279
    %v287 = vmax.f32 %v263, %v280
    %v288 = vmax.f32 %v264, %v281
    %v289 = vmax.f32 %v265, %v277
    %v290 = vld [vmem:[#allocation5] sm:$0xff]
    %v291 = vld [vmem:[#allocation5 + $0x8] sm:$0xff]
    %v292 = vld [vmem:[#allocation5 + $0x10] sm:$0xff]
    %v293 = vld [vmem:[#allocation5 + $0x18] sm:$0xff]
    %v294 = vld [vmem:[#allocation5 + $0x20] sm:$0xff]
    %v295 = vld [vmem:[#allocation5 + $0x28] sm:$0xff]
    %v296 = vld [vmem:[#allocation5 + $0x30] sm:$0xff]
    %v297 = vld [vmem:[#allocation5 + $0x38] sm:$0xff]
    %v298 = vld [vmem:[#allocation5 + $0x40] sm:$0xff]
    %v299 = vld [vmem:[#allocation5 + $0x48] sm:$0xff]
    %v300 = vld [vmem:[#allocation5 + $0x50] sm:$0xff]
    %v301 = vld [vmem:[#allocation5 + $0x58] sm:$0xff]
    %v302 = vld [vmem:[#allocation5 + $0x60] sm:$0xff]
    %v303 = vld [vmem:[#allocation5 + $0x68] sm:$0xff]
    %v304 = vld [vmem:[#allocation5 + $0x70] sm:$0xff]
    %v305 = vld [vmem:[#allocation5 + $0x78] sm:$0xff]
    %v306 = vld [vmem:[#allocation5 + $0x80] sm:$0xff]
    %v307 = vld [vmem:[#allocation5 + $0x88] sm:$0xff]
    %v308 = vld [vmem:[#allocation5 + $0x90] sm:$0xff]
    %v309 = vld [vmem:[#allocation5 + $0x98] sm:$0xff]
    %v310 = vld [vmem:[#allocation5 + $0xa0] sm:$0xff]
    %v311 = vld [vmem:[#allocation5 + $0xa8] sm:$0xff]
    %v312 = vld [vmem:[#allocation5 + $0xb0] sm:$0xff]
    %v313 = vld [vmem:[#allocation5 + $0xb8] sm:$0xff]
    %v314 = vld [vmem:[#allocation5 + $0xc0] sm:$0xff]
    %v315 = vld [vmem:[#allocation5 + $0xc8] sm:$0xff]
    %v316 = vld [vmem:[#allocation5 + $0xd0] sm:$0xff]
    %v317 = vld [vmem:[#allocation5 + $0xd8] sm:$0xff]
    %v318 = vld [vmem:[#allocation5 + $0xe0] sm:$0xff]
    %v319 = vld [vmem:[#allocation5 + $0xe8] sm:$0xff]
    %v320 = vld [vmem:[#allocation5 + $0xf0] sm:$0xff]
    %v321 = vld [vmem:[#allocation5 + $0xf8] sm:$0xff]
    %v322 = vld [vmem:[#allocation5 + $0x100] sm:$0xff]
    %v323 = vld [vmem:[#allocation5 + $0x108] sm:$0xff]
    %v324 = vld [vmem:[#allocation5 + $0x110] sm:$0xff]
    %v325 = vld [vmem:[#allocation5 + $0x118] sm:$0xff]
    %v326 = vld [vmem:[#allocation5 + $0x120] sm:$0xff]
    %v327 = vld [vmem:[#allocation5 + $0x128] sm:$0xff]
    %v328 = vld [vmem:[#allocation5 + $0x130] sm:$0xff]
    %v329 = vld [vmem:[#allocation5 + $0x138] sm:$0xff]
    %v330 = vld [vmem:[#allocation5 + $0x140] sm:$0xff]
    %v331 = vld [vmem:[#allocation5 + $0x148] sm:$0xff]
    %v332 = vld [vmem:[#allocation5 + $0x150] sm:$0xff]
    %v333 = vld [vmem:[#allocation5 + $0x158] sm:$0xff]
    %v334 = vld [vmem:[#allocation5 + $0x160] sm:$0xff]
    %v335 = vld [vmem:[#allocation5 + $0x168] sm:$0xff]
    %v336 = vld [vmem:[#allocation5 + $0x170] sm:$0xff]
    %v337 = vld [vmem:[#allocation5 + $0x178] sm:$0xff]
    %v338 = vld [vmem:[#allocation5 + $0x180] sm:$0x3f]
    %v339 = vld [vmem:[%s4] sm:$0x1]
    %v341 = vlaneseq
    %v342 = vshrl.u32 %v341, 7
    %v343 = vsub.s32 0, %v342
    %v344 = vrot.slane %v339, %v343
    %vm346 = vcmask 48128
    %v348 = vsel %vm346, %v289, 0
    %vm350 = vcmask 1045504
    %v352 = vsel %vm350, %v338, 0
    %354 = vmatprep.subr.mxu0 0.0
    %355 = vmatpush1.msra.mxu0 %v305
    %356 = vmatprep.subr.mxu0 0.0
    %357 = vmatpush1.msra.mxu0 %v304
    %358 = vmatprep.subr.mxu0 0.0
    %359 = vmatpush1.msra.mxu0 %v303
    %360 = vmatprep.subr.mxu0 0.0
    %361 = vmatpush1.msra.mxu0 %v302
    %362 = vmatprep.subr.mxu0 0.0
    %363 = vmatpush1.msra.mxu0 %v301
    %364 = vmatprep.subr.mxu0 0.0
    %365 = vmatpush1.msra.mxu0 %v300
    %366 = vmatprep.subr.mxu0 0.0
    %367 = vmatpush1.msra.mxu0 %v299
    %368 = vmatprep.subr.mxu0 0.0
    %369 = vmatpush1.msra.mxu0 %v298
    %370 = vmatprep.subr.mxu0 0.0
    %371 = vmatpush1.msra.mxu0 %v297
    %372 = vmatprep.subr.mxu0 0.0
    %373 = vmatpush1.msra.mxu0 %v296
    %374 = vmatprep.subr.mxu0 0.0
    %375 = vmatpush1.msra.mxu0 %v295
    %376 = vmatprep.subr.mxu0 0.0
    %377 = vmatpush1.msra.mxu0 %v294
    %378 = vmatprep.subr.mxu0 0.0
    %379 = vmatpush1.msra.mxu0 %v293
    %380 = vmatprep.subr.mxu0 0.0
    %381 = vmatpush1.msra.mxu0 %v292
    %382 = vmatprep.subr.mxu0 0.0
    %383 = vmatpush1.msra.mxu0 %v291
    %384 = vmatprep.subr.mxu0 0.0
    %385 = vmatpush1.msra.mxu0 %v290
    %386 = vmatprep.subr.mxu0 0.0
    %387 = vmatpush2.msra.mxu0 %v321
    %388 = vmatprep.subr.mxu0 0.0
    %389 = vmatpush2.msra.mxu0 %v320
    %390 = vmatprep.subr.mxu0 0.0
    %391 = vmatpush2.msra.mxu0 %v319
    %392 = vmatprep.subr.mxu0 0.0
    %393 = vmatpush2.msra.mxu0 %v318
    %394 = vmatprep.subr.mxu0 0.0
    %395 = vmatpush2.msra.mxu0 %v317
    %396 = vmatprep.subr.mxu0 0.0
    %397 = vmatpush2.msra.mxu0 %v316
    %398 = vmatprep.subr.mxu0 0.0
    %399 = vmatpush2.msra.mxu0 %v315
    %400 = vmatprep.subr.mxu0 0.0
    %401 = vmatpush2.msra.mxu0 %v314
    %402 = vmatprep.subr.mxu0 0.0
    %403 = vmatpush2.msra.mxu0 %v313
    %404 = vmatprep.subr.mxu0 0.0
    %405 = vmatpush2.msra.mxu0 %v312
    %406 = vmatprep.subr.mxu0 0.0
    %407 = vmatpush2.msra.mxu0 %v311
    %408 = vmatprep.subr.mxu0 0.0
    %409 = vmatpush2.msra.mxu0 %v310
    %410 = vmatprep.subr.mxu0 0.0
    %411 = vmatpush2.msra.mxu0 %v309
    %412 = vmatprep.subr.mxu0 0.0
    %413 = vmatpush2.msra.mxu0 %v308
    %414 = vmatprep.subr.mxu0 0.0
    %415 = vmatpush2.msra.mxu0 %v307
    %416 = vmatprep.subr.mxu0 0.0
    %417 = vmatpush2.msra.mxu0 %v306
    %418 = vmatprep.mubr.f32.mxu0 %v287
    %419 = vmatmul.mubr.f32.gmra.mxu0 %v286
    %v420 = vpop.f32.mrf.mxu0
    %v421 = vadd.f32 %v344, %v420
    %v422 = vpop.f32.mrf.mxu0
    %423 = vdwg.mxu0
    %424 = vmatprep.subr.mxu0 0.0
    %425 = vmatpush1.msra.mxu0 %v337
    %426 = vmatprep.subr.mxu0 0.0
    %427 = vmatpush1.msra.mxu0 %v336
    %428 = vmatprep.subr.mxu0 0.0
    %429 = vmatpush1.msra.mxu0 %v335
    %430 = vmatprep.subr.mxu0 0.0
    %431 = vmatpush1.msra.mxu0 %v334
    %432 = vmatprep.subr.mxu0 0.0
    %433 = vmatpush1.msra.mxu0 %v333
    %434 = vmatprep.subr.mxu0 0.0
    %435 = vmatpush1.msra.mxu0 %v332
    %436 = vmatprep.subr.mxu0 0.0
    %437 = vmatpush1.msra.mxu0 %v331
    %438 = vmatprep.subr.mxu0 0.0
    %439 = vmatpush1.msra.mxu0 %v330
    %440 = vmatprep.subr.mxu0 0.0
    %441 = vmatpush1.msra.mxu0 %v329
    %442 = vmatprep.subr.mxu0 0.0
    %443 = vmatpush1.msra.mxu0 %v328
    %444 = vmatprep.subr.mxu0 0.0
    %445 = vmatpush1.msra.mxu0 %v327
    %446 = vmatprep.subr.mxu0 0.0
    %447 = vmatpush1.msra.mxu0 %v326
    %448 = vmatprep.subr.mxu0 0.0
    %449 = vmatpush1.msra.mxu0 %v325
    %450 = vmatprep.subr.mxu0 0.0
    %451 = vmatpush1.msra.mxu0 %v324
    %452 = vmatprep.subr.mxu0 0.0
    %453 = vmatpush1.msra.mxu0 %v323
    %454 = vmatprep.subr.mxu0 0.0
    %455 = vmatpush1.msra.mxu0 %v322
    %456 = vmatprep.subr.mxu0 0.0
    %457 = vmatpush2.msra.mxu0 0.0
    %458 = vmatprep.subr.mxu0 0.0
    %459 = vmatpush2.msra.mxu0 0.0
    %460 = vmatprep.subr.mxu0 0.0
    %461 = vmatpush2.msra.mxu0 0.0
    %462 = vmatprep.subr.mxu0 0.0
    %463 = vmatpush2.msra.mxu0 0.0
    %464 = vmatprep.subr.mxu0 0.0
    %465 = vmatpush2.msra.mxu0 0.0
    %466 = vmatprep.subr.mxu0 0.0
    %467 = vmatpush2.msra.mxu0 0.0
    %468 = vmatprep.subr.mxu0 0.0
    %469 = vmatpush2.msra.mxu0 0.0
    %470 = vmatprep.subr.mxu0 0.0
    %471 = vmatpush2.msra.mxu0 0.0
    %472 = vmatprep.subr.mxu0 0.0
    %473 = vmatpush2.msra.mxu0 0.0
    %474 = vmatprep.subr.mxu0 0.0
    %475 = vmatpush2.msra.mxu0 0.0
    %476 = vmatprep.subr.mxu0 0.0
    %477 = vmatpush2.msra.mxu0 0.0
    %478 = vmatprep.subr.mxu0 0.0
    %479 = vmatpush2.msra.mxu0 0.0
    %480 = vmatprep.subr.mxu0 0.0
    %481 = vmatpush2.msra.mxu0 0.0
    %482 = vmatprep.subr.mxu0 0.0
    %483 = vmatpush2.msra.mxu0 0.0
    %484 = vmatprep.subr.mxu0 0.0
    %485 = vmatpush2.msra.mxu0 0.0
    %486 = vmatprep.subr.mxu0 0.0
    %487 = vmatpush2.msra.mxu0 %v352
    %488 = vmatprep.mubr.f32.mxu0 %v348
    %489 = vmatmul.mubr.f32.gmra.mxu0 %v288
    %v490 = vpop.f32.mrf.mxu0
    %v491 = vadd.f32 %v421, %v490
    %v492 = vpop.f32.mrf.mxu0
    %493 = vdwg.mxu0
    %v494 = vmax.f32 %v491, 0.0
    %496 = vrot.lane.b32.xlu0 %v494, 108
    %v497 = vpop.permute.xlu0 %496
    %v499 = vmax.f32 %v494, %v497
    %500 = vrot.lane.b32.xlu0 %v494, 88
    %v501 = vpop.permute.xlu0 %500
    %v503 = vmax.f32 %v499, %v501
    %504 = vrot.lane.b32.xlu0 %v494, 68
    %v505 = vpop.permute.xlu0 %504
    %v507 = vmax.f32 %v503, %v505
    %508 = vrot.lane.b32.xlu0 %v494, 48
    %v509 = vpop.permute.xlu0 %508
    %v511 = vmax.f32 %v507, %v509
    %512 = vrot.lane.b32.xlu0 %v494, 28
    %v513 = vpop.permute.xlu0 %512
    %v515 = vmax.f32 %v511, %v513
    %v516 = vld [vmem:[%s5] sm:$0xff]
    %v517 = vld [vmem:[%s5 + $0x8] sm:$0xff]
    %v518 = vld [vmem:[%s5 + $0x10] sm:$0xf]
    %v519 = vld [vmem:[%s6] sm:$0x1]
    %v521 = vlaneseq
    %v522 = vshrl.u32 %v521, 7
    %v523 = vsub.s32 0, %v522
    %v524 = vrot.slane %v519, %v523
    %vm526 = vcmask 162816
    %v528 = vsel %vm526, %v515, 0
    %vm530 = vcmask 1043456
    %v532 = vsel %vm530, %v518, 0
    %534 = vmatprep.subr.mxu0 0.0
    %535 = vmatpush1.msra.mxu0 0.0
    %536 = vmatprep.subr.mxu0 0.0
    %537 = vmatpush1.msra.mxu0 0.0
    %538 = vmatprep.subr.mxu0 0.0
    %539 = vmatpush1.msra.mxu0 0.0
    %540 = vmatprep.subr.mxu0 0.0
    %541 = vmatpush1.msra.mxu0 0.0
    %542 = vmatprep.subr.mxu0 0.0
    %543 = vmatpush1.msra.mxu0 0.0
    %544 = vmatprep.subr.mxu0 0.0
    %545 = vmatpush1.msra.mxu0 0.0
    %546 = vmatprep.subr.mxu0 0.0
    %547 = vmatpush1.msra.mxu0 0.0
    %548 = vmatprep.subr.mxu0 0.0
    %549 = vmatpush1.msra.mxu0 0.0
    %550 = vmatprep.subr.mxu0 0.0
    %551 = vmatpush1.msra.mxu0 0.0
    %552 = vmatprep.subr.mxu0 0.0
    %553 = vmatpush1.msra.mxu0 0.0
    %554 = vmatprep.subr.mxu0 0.0
    %555 = vmatpush1.msra.mxu0 0.0
    %556 = vmatprep.subr.mxu0 0.0
    %557 = vmatpush1.msra.mxu0 0.0
    %558 = vmatprep.subr.mxu0 0.0
    %559 = vmatpush1.msra.mxu0 0.0
    %560 = vmatprep.subr.mxu0 0.0
    %561 = vmatpush1.msra.mxu0 %v532
    %562 = vmatprep.subr.mxu0 0.0
    %563 = vmatpush1.msra.mxu0 %v517
    %564 = vmatprep.subr.mxu0 0.0
    %565 = vmatpush1.msra.mxu0 %v516
    %566 = vmatprep.subr.mxu0 0.0
    %567 = vmatpush2.msra.mxu0 0.0
    %568 = vmatprep.subr.mxu0 0.0
    %569 = vmatpush2.msra.mxu0 0.0
    %570 = vmatprep.subr.mxu0 0.0
    %571 = vmatpush2.msra.mxu0 0.0
    %572 = vmatprep.subr.mxu0 0.0
    %573 = vmatpush2.msra.mxu0 0.0
    %574 = vmatprep.subr.mxu0 0.0
    %575 = vmatpush2.msra.mxu0 0.0
    %576 = vmatprep.subr.mxu0 0.0
    %577 = vmatpush2.msra.mxu0 0.0
    %578 = vmatprep.subr.mxu0 0.0
    %579 = vmatpush2.msra.mxu0 0.0
    %580 = vmatprep.subr.mxu0 0.0
    %581 = vmatpush2.msra.mxu0 0.0
    %582 = vmatprep.subr.mxu0 0.0
    %583 = vmatpush2.msra.mxu0 0.0
    %584 = vmatprep.subr.mxu0 0.0
    %585 = vmatpush2.msra.mxu0 0.0
    %586 = vmatprep.subr.mxu0 0.0
    %587 = vmatpush2.msra.mxu0 0.0
    %588 = vmatprep.subr.mxu0 0.0
    %589 = vmatpush2.msra.mxu0 0.0
    %590 = vmatprep.subr.mxu0 0.0
    %591 = vmatpush2.msra.mxu0 0.0
    %592 = vmatprep.subr.mxu0 0.0
    %593 = vmatpush2.msra.mxu0 0.0
    %594 = vmatprep.subr.mxu0 0.0
    %595 = vmatpush2.msra.mxu0 0.0
    %596 = vmatprep.subr.mxu0 0.0
    %597 = vmatpush2.msra.mxu0 0.0
    %598 = vmatprep.mubr.f32.mxu0 0.0
    %599 = vmatmul.mubr.f32.gmra.mxu0 %v528
    %v600 = vpop.f32.mrf.mxu0
    %v601 = vadd.f32 %v524, %v600
    %v602 = vpop.f32.mrf.mxu0
    %603 = vdwg.mxu0
    %v604 = vmax.f32 %v601, 0.0
    %v605 = vld [vmem:[%s7] sm:$0xff]
    %v606 = vld [vmem:[%s7 + $0x8] sm:$0x3]
    %v607 = vld [vmem:[%s8] sm:$0x1]
    %v609 = vlaneseq
    %v610 = vshrl.u32 %v609, 7
    %v611 = vsub.s32 0, %v610
    %v612 = vrot.slane %v607, %v611
    %vm614 = vcmask 80896
    %v616 = vsel %vm614, %v604, 0
    %vm618 = vcmask 1041408
    %v620 = vsel %vm618, %v606, 0
    %622 = vmatprep.subr.mxu0 0.0
    %623 = vmatpush1.msra.mxu0 0.0
    %624 = vmatprep.subr.mxu0 0.0
    %625 = vmatpush1.msra.mxu0 0.0
    %626 = vmatprep.subr.mxu0 0.0
    %627 = vmatpush1.msra.mxu0 0.0
    %628 = vmatprep.subr.mxu0 0.0
    %629 = vmatpush1.msra.mxu0 0.0
    %630 = vmatprep.subr.mxu0 0.0
    %631 = vmatpush1.msra.mxu0 0.0
    %632 = vmatprep.subr.mxu0 0.0
    %633 = vmatpush1.msra.mxu0 0.0
    %634 = vmatprep.subr.mxu0 0.0
    %635 = vmatpush1.msra.mxu0 0.0
    %636 = vmatprep.subr.mxu0 0.0
    %637 = vmatpush1.msra.mxu0 0.0
    %638 = vmatprep.subr.mxu0 0.0
    %639 = vmatpush1.msra.mxu0 0.0
    %640 = vmatprep.subr.mxu0 0.0
    %641 = vmatpush1.msra.mxu0 0.0
    %642 = vmatprep.subr.mxu0 0.0
    %643 = vmatpush1.msra.mxu0 0.0
    %644 = vmatprep.subr.mxu0 0.0
    %645 = vmatpush1.msra.mxu0 0.0
    %646 = vmatprep.subr.mxu0 0.0
    %647 = vmatpush1.msra.mxu0 0.0
    %648 = vmatprep.subr.mxu0 0.0
    %649 = vmatpush1.msra.mxu0 0.0
    %650 = vmatprep.subr.mxu0 0.0
    %651 = vmatpush1.msra.mxu0 %v620
    %652 = vmatprep.subr.mxu0 0.0
    %653 = vmatpush1.msra.mxu0 %v605
    %654 = vmatprep.subr.mxu0 0.0
    %655 = vmatpush2.msra.mxu0 0.0
    %656 = vmatprep.subr.mxu0 0.0
    %657 = vmatpush2.msra.mxu0 0.0
    %658 = vmatprep.subr.mxu0 0.0
    %659 = vmatpush2.msra.mxu0 0.0
    %660 = vmatprep.subr.mxu0 0.0
    %661 = vmatpush2.msra.mxu0 0.0
    %662 = vmatprep.subr.mxu0 0.0
    %663 = vmatpush2.msra.mxu0 0.0
    %664 = vmatprep.subr.mxu0 0.0
    %665 = vmatpush2.msra.mxu0 0.0
    %666 = vmatprep.subr.mxu0 0.0
    %667 = vmatpush2.msra.mxu0 0.0
    %668 = vmatprep.subr.mxu0 0.0
    %669 = vmatpush2.msra.mxu0 0.0
    %670 = vmatprep.subr.mxu0 0.0
    %671 = vmatpush2.msra.mxu0 0.0
    %672 = vmatprep.subr.mxu0 0.0
    %673 = vmatpush2.msra.mxu0 0.0
    %674 = vmatprep.subr.mxu0 0.0
    %675 = vmatpush2.msra.mxu0 0.0
    %676 = vmatprep.subr.mxu0 0.0
    %677 = vmatpush2.msra.mxu0 0.0
    %678 = vmatprep.subr.mxu0 0.0
    %679 = vmatpush2.msra.mxu0 0.0
    %680 = vmatprep.subr.mxu0 0.0
    %681 = vmatpush2.msra.mxu0 0.0
    %682 = vmatprep.subr.mxu0 0.0
    %683 = vmatpush2.msra.mxu0 0.0
    %684 = vmatprep.subr.mxu0 0.0
    %685 = vmatpush2.msra.mxu0 0.0
    %686 = vmatprep.mubr.f32.mxu0 0.0
    %687 = vmatmul.mubr.f32.gmra.mxu0 %v616
    %v688 = vpop.f32.mrf.mxu0
    %v689 = vadd.f32 %v612, %v688
    %v690 = vpop.f32.mrf.mxu0
    %691 = vdwg.mxu0
    %692 = vxpose.xlu0.b32.start [1/16] %v689, 128
    %693 = vxpose.xlu0.b32.cont [2/16] 0.0, 128
    %694 = vxpose.xlu0.b32.cont [3/16] 0.0, 128
    %695 = vxpose.xlu0.b32.cont [4/16] 0.0, 128
    %696 = vxpose.xlu0.b32.cont [5/16] 0.0, 128
    %697 = vxpose.xlu0.b32.cont [6/16] 0.0, 128
    %698 = vxpose.xlu0.b32.cont [7/16] 0.0, 128
    %699 = vxpose.xlu0.b32.cont [8/16] 0.0, 128
    %700 = vxpose.xlu0.b32.cont [9/16] 0.0, 128
    %701 = vxpose.xlu0.b32.cont [10/16] 0.0, 128
    %702 = vxpose.xlu0.b32.cont [11/16] 0.0, 128
    %703 = vxpose.xlu0.b32.cont [12/16] 0.0, 128
    %704 = vxpose.xlu0.b32.cont [13/16] 0.0, 128
    %705 = vxpose.xlu0.b32.cont [14/16] 0.0, 128
    %706 = vxpose.xlu0.b32.cont [15/16] 0.0, 128
    %707 = vxpose.xlu0.b32.end [16/16] 0.0, 128
    %v708 = vpop.trf.xlu0
    %v709 = vpop.trf.xlu0
    %v710 = vpop.trf.xlu0
    %v711 = vpop.trf.xlu0
    %v712 = vpop.trf.xlu0
    %v713 = vpop.trf.xlu0
    %v714 = vpop.trf.xlu0
    %v715 = vpop.trf.xlu0
    %v716 = vpop.trf.xlu0
    %v717 = vpop.trf.xlu0
    %v718 = vpop.trf.xlu0
    %v719 = vpop.trf.xlu0
    %v720 = vpop.trf.xlu0
    %v721 = vpop.trf.xlu0
    %v722 = vpop.trf.xlu0
    %v723 = vpop.trf.xlu0
    %vm724 = vcmask 64512
    %725 = vst.msk [vmem:[#allocation7] sm:$0xff] %vm724, %v708
    // Predicated region
    $region46: #{tpu_custom_call.1} parent=1 // pred_check
      _
    $region47: #{tpu_custom_call.1} parent=1 // pred_check_branch
      %727 = sbr.rel (0) target = $region49
    $region48: #{tpu_custom_call.1} parent=1 // pred_region
      %s729 = ssub.s32 128, 128
      %730 = vsyncadd [#allocation4], %s729
      %s732 = sshll.u32 [#allocation7], 4
      %s733 = int_to_ptr.vmem [resolvable:$true] %s732
      %735 = dma.vmem_to_hbm [thread:$0]  %s733, 128, %s9, [#allocation4]
    $region49: #{tpu_custom_call.1} parent=1 // pred_fallthru
      _
    // Predicated region
    $region50: #{tpu_custom_call.1} parent=1 // pred_check
      _
    $region51: #{tpu_custom_call.1} parent=1 // pred_check_branch
      %737 = sbr.rel (0) target = $region53
    $region52: #{tpu_custom_call.1} parent=1 // pred_region
      %738 = dma.done [#allocation4], 128
    $region53: #{tpu_custom_call.1} parent=1 // pred_fallthru
      _
    %739 = vsyncpa [#allocation3], 1
    %740 = vsyncpa [#allocation6], 1
    %741 = vsyncpa [#allocation4], 1

</llo_original>
